<compile_context>
chip_gen: v6e
topology: v6e:2x2x1
jax: 0.10.0
libtpu: 0.0.40
codegen_flags: <defaults>
</compile_context>

<pallas_src>
import numpy as np
import jax
import jax.numpy as jnp
from jax.experimental import pallas as pl
from jax.experimental.pallas import tpu as pltpu

CONV_OUT = 64  # fixed by the module: nn.Conv1d(input_channels, 64, ...)


# ----------------------------------------------------------------------------
# Fused kernel: conv (single im2col matmul) + ReLU + maxpool + FC stack
# ----------------------------------------------------------------------------
def make_fused_cnn_kernel(num_linear, n_batch, p_half):
    def kernel(xeo_ref, wc_ref, cb_ref, *refs):
        # refs = (w1_blocks, b1, w2, b2, ..., w_last, b_last, o_ref)
        o_ref = refs[2 * num_linear]
        f32, bf16 = jnp.float32, jnp.bfloat16

        # Conv1d(k=3, pad=1) over every (parity, position, sample) row: ONE matmul.
        yeo = jnp.dot(xeo_ref[...], wc_ref[...],
                      preferred_element_type=f32)                  # [2*P*N, 64]
        half = p_half * n_batch
        # ReLU + MaxPool1d(2,2): pool(relu(y)) == relu(max(even, odd) + bias);
        # the shared conv bias is added once, after the max.
        pooled = jnp.maximum(
            jnp.maximum(yeo[:half], yeo[half:]) + cb_ref[...], 0.0)  # [P*N, 64]
        pooled = pooled.astype(bf16)

        # Flatten + FC1 without any VMEM scratch: accumulate per pool position.
        # Rows of `pooled` are (position, sample)-major, so pooled_p is a
        # contiguous static slice; W1 was pre-split into [P, 64, F] blocks in
        # the wrapper (matching the per-position flatten order).
        w1_ref, b1_ref = refs[0], refs[1]
        h = jnp.dot(pooled[0:n_batch], w1_ref[0], preferred_element_type=f32)
        for p in range(1, p_half):
            h = h + jnp.dot(pooled[p * n_batch:(p + 1) * n_batch], w1_ref[p],
                            preferred_element_type=f32)
        h = h + b1_ref[...]

        # Remaining FC stack: ReLU -> Dropout(identity in eval) -> Linear.
        for i in range(1, num_linear):
            h = jnp.maximum(h, 0.0).astype(bf16)
            h = jnp.dot(h, refs[2 * i][...],
                        preferred_element_type=f32) + refs[2 * i + 1][...]
        o_ref[...] = h   # [N, out_pad], lane-dense (padded to a multiple of 128)

    return kernel


def cnn_forward(x, conv_w, conv_b, fc_ws, fc_bs):
    N, C, L = x.shape
    assert L % 2 == 0, "even/odd MaxPool1d(2,2) fusion assumes even sequence length"
    P = L // 2
    num_linear = len(fc_ws)
    out_dim = fc_ws[-1].shape[1]
    out_pad = ((out_dim + 127) // 128) * 128
    bf16 = jnp.bfloat16

    # ---- wrapper-side layout plumbing only (no compute hoisted) ----
    zeros = jnp.zeros((N, C, 1), x.dtype)
    x_left = jnp.concatenate([zeros, x[:, :, :-1]], axis=-1)   # x[..., l-1], zero pad
    x_right = jnp.concatenate([x[:, :, 1:], zeros], axis=-1)   # x[..., l+1], zero pad
    im2col = jnp.concatenate([x_left, x, x_right], axis=1)     # [N, 3C, L], row = k*C + c
    im2col = jnp.transpose(im2col, (2, 0, 1))                  # [L, N, 3C]
    xe = im2col[0::2].reshape(P * N, 3 * C)                    # even conv positions, (p, n)
    xo = im2col[1::2].reshape(P * N, 3 * C)                    # odd conv positions,  (p, n)
    xeo = jnp.concatenate([xe, xo], axis=0).astype(bf16)       # [2*P*N, 3C]

    wc = jnp.transpose(conv_w, (2, 1, 0)).reshape(3 * C, CONV_OUT).astype(bf16)
    cb = conv_b.reshape(1, CONV_OUT).astype(jnp.float32)

    fc_ws, fc_bs = list(fc_ws), list(fc_bs)
    pad = out_pad - out_dim
    if pad:   # lane-pad the final Linear so the epilogue store is unmasked
        fc_ws[-1] = jnp.pad(fc_ws[-1], ((0, 0), (0, pad)))
        fc_bs[-1] = jnp.pad(fc_bs[-1], (0, pad))

    # FC1 weight: torch channel-major flatten index o*P + p  ->  [P, 64, F] blocks.
    w1 = fc_ws[0].reshape(CONV_OUT, P, -1).transpose(1, 0, 2).astype(bf16)
    fc_args = [w1, fc_bs[0].reshape(1, -1).astype(jnp.float32)]
    for w, b in zip(fc_ws[1:], fc_bs[1:]):
        fc_args += [w.astype(bf16), b.reshape(1, -1).astype(jnp.float32)]

    num_inputs = 3 + 2 * num_linear
    out = pl.pallas_call(
        make_fused_cnn_kernel(num_linear, N, P),
        out_shape=jax.ShapeDtypeStruct((N, out_pad), jnp.float32),
        in_specs=[pl.BlockSpec(memory_space=pltpu.MemorySpace.VMEM)
                  for _ in range(num_inputs)],
        out_specs=pl.BlockSpec(memory_space=pltpu.MemorySpace.VMEM),
    )(xeo, wc, cb, *fc_args)
    return out[:, :out_dim]


# ----------------------------------------------------------------------------
# Deterministic parameter init + pure-JAX reference (f32)
# ----------------------------------------------------------------------------
def init_params(key, input_channels, output_size, num_fc_layers, fc_units, seq_len):
    num_linear = num_fc_layers + 1
    keys = jax.random.split(key, 2 + 2 * num_linear)
    bound = 1.0 / np.sqrt(input_channels * 3)
    conv_w = jax.random.uniform(keys[0], (CONV_OUT, input_channels, 3),
                                jnp.float32, -bound, bound)
    conv_b = jax.random.uniform(keys[1], (CONV_OUT,), jnp.float32, -bound, bound)

    dims = [CONV_OUT * (seq_len // 2)] + [fc_units] * num_fc_layers + [output_size]
    fc_ws, fc_bs = [], []
    for i in range(num_linear):
        bound = 1.0 / np.sqrt(dims[i])
        fc_ws.append(jax.random.uniform(keys[2 + 2 * i], (dims[i], dims[i + 1]),
                                        jnp.float32, -bound, bound))
        fc_bs.append(jax.random.uniform(keys[3 + 2 * i], (dims[i + 1],),
                                        jnp.float32, -bound, bound))
    return conv_w, conv_b, fc_ws, fc_bs


def ref_forward(x, conv_w, conv_b, fc_ws, fc_bs):
    y = jax.lax.conv_general_dilated(
        x, conv_w, window_strides=(1,), padding=((1, 1),),
        dimension_numbers=("NCH", "OIH", "NCH"))
    y = y + conv_b[None, :, None]
    y = jnp.maximum(y, 0.0)
    N, O, L = y.shape
    y = y.reshape(N, O, L // 2, 2).max(axis=-1)
    h = y.reshape(N, -1)
    for i, (w, b) in enumerate(zip(fc_ws, fc_bs)):
        h = h @ w + b
        if i < len(fc_ws) - 1:
            h = jnp.maximum(h, 0.0)
    return h


if __name__ == "__main__":
    # Small shapes consistent with the module (input_channels == seq_len so the
    # module's flatten-size formula holds, num_conv_layers = 1).
    N, C, L = 2, 16, 16
    output_size, num_fc_layers, fc_units = 10, 2, 32

    key = jax.random.PRNGKey(0)
    k_x, k_p = jax.random.split(key)
    x = jax.random.normal(k_x, (N, C, L), jnp.float32)
    conv_w, conv_b, fc_ws, fc_bs = init_params(
        k_p, C, output_size, num_fc_layers, fc_units, L)

    fwd = jax.jit(cnn_forward)
    out = jax.block_until_ready(fwd(x, conv_w, conv_b, fc_ws, fc_bs))

    ref = jax.block_until_ready(ref_forward(x, conv_w, conv_b, fc_ws, fc_bs))
    assert out.shape == (N, output_size), out.shape
    # Kernel uses bf16 matmul inputs with f32 accumulation vs. the pure-f32 reference.
    np.testing.assert_allclose(np.asarray(out), np.asarray(ref),
                               rtol=2e-2, atol=2e-2)
    print("KERNEL_OK")
</pallas_src>

<mosaic_0001>
module attributes {stable_mosaic.version = 11 : i64} {
  func.func @kernel(%arg0: memref<32x48xbf16, #tpu.memory_space<vmem>>, %arg1: memref<48x64xbf16, #tpu.memory_space<vmem>>, %arg2: memref<1x64xf32, #tpu.memory_space<vmem>>, %arg3: memref<8x64x32xbf16, #tpu.memory_space<vmem>>, %arg4: memref<1x32xf32, #tpu.memory_space<vmem>>, %arg5: memref<32x32xbf16, #tpu.memory_space<vmem>>, %arg6: memref<1x32xf32, #tpu.memory_space<vmem>>, %arg7: memref<32x128xbf16, #tpu.memory_space<vmem>>, %arg8: memref<1x128xf32, #tpu.memory_space<vmem>>, %arg9: memref<2x128xf32, #tpu.memory_space<vmem>>) attributes {dimension_semantics = [], scalar_prefetch = 0 : i64, scratch_operands = 0 : i64, tpu.core_type = #tpu.core_type<tc>} {
    %c0 = arith.constant 0 : index
    %c0_0 = arith.constant 0 : index
    %0 = vector.load %arg0[%c0, %c0_0] : memref<32x48xbf16, #tpu.memory_space<vmem>>, vector<32x48xbf16>
    %c0_1 = arith.constant 0 : index
    %c0_2 = arith.constant 0 : index
    %1 = vector.load %arg1[%c0_1, %c0_2] : memref<48x64xbf16, #tpu.memory_space<vmem>>, vector<48x64xbf16>
    %cst = arith.constant dense<0.000000e+00> : vector<32x64xf32>
    %2 = tpu.matmul %0, %1, %cst {dimension_numbers = #tpu.dot_dimension_numbers<[1], [0], [0], [1], [0, 0, 1, 1], [], []>} : vector<32x48xbf16>, vector<48x64xbf16>, vector<32x64xf32> -> vector<32x64xf32>
    %3 = vector.extract_strided_slice %2 {offsets = [0, 0], sizes = [16, 64], strides = [1, 1]} : vector<32x64xf32> to vector<16x64xf32>
    %4 = vector.extract_strided_slice %2 {offsets = [16, 0], sizes = [16, 64], strides = [1, 1]} : vector<32x64xf32> to vector<16x64xf32>
    %5 = arith.maximumf %3, %4 : vector<16x64xf32>
    %c0_3 = arith.constant 0 : index
    %c0_4 = arith.constant 0 : index
    %6 = vector.load %arg2[%c0_3, %c0_4] : memref<1x64xf32, #tpu.memory_space<vmem>>, vector<1x64xf32>
    %7 = vector.broadcast %6 : vector<1x64xf32> to vector<16x64xf32>
    %8 = arith.addf %5, %7 : vector<16x64xf32>
    %cst_5 = arith.constant 0.000000e+00 : f32
    %9 = vector.broadcast %cst_5 : f32 to vector<16x64xf32>
    %10 = arith.maximumf %8, %9 : vector<16x64xf32>
    %11 = arith.truncf %10 : vector<16x64xf32> to vector<16x64xbf16>
    %12 = vector.extract_strided_slice %11 {offsets = [0, 0], sizes = [2, 64], strides = [1, 1]} : vector<16x64xbf16> to vector<2x64xbf16>
    %c0_6 = arith.constant 0 : index
    %c0_7 = arith.constant 0 : index
    %c0_8 = arith.constant 0 : index
    %13 = vector.load %arg3[%c0_6, %c0_7, %c0_8] : memref<8x64x32xbf16, #tpu.memory_space<vmem>>, vector<1x64x32xbf16>
    %14 = vector.shape_cast %13 : vector<1x64x32xbf16> to vector<64x32xbf16>
    %cst_9 = arith.constant dense<0.000000e+00> : vector<2x32xf32>
    %15 = tpu.matmul %12, %14, %cst_9 {dimension_numbers = #tpu.dot_dimension_numbers<[1], [0], [0], [1], [0, 0, 1, 1], [], []>} : vector<2x64xbf16>, vector<64x32xbf16>, vector<2x32xf32> -> vector<2x32xf32>
    %16 = vector.extract_strided_slice %11 {offsets = [2, 0], sizes = [2, 64], strides = [1, 1]} : vector<16x64xbf16> to vector<2x64xbf16>
    %c1 = arith.constant 1 : index
    %c0_10 = arith.constant 0 : index
    %c0_11 = arith.constant 0 : index
    %17 = vector.load %arg3[%c1, %c0_10, %c0_11] : memref<8x64x32xbf16, #tpu.memory_space<vmem>>, vector<1x64x32xbf16>
    %18 = vector.shape_cast %17 : vector<1x64x32xbf16> to vector<64x32xbf16>
    %cst_12 = arith.constant dense<0.000000e+00> : vector<2x32xf32>
    %19 = tpu.matmul %16, %18, %cst_12 {dimension_numbers = #tpu.dot_dimension_numbers<[1], [0], [0], [1], [0, 0, 1, 1], [], []>} : vector<2x64xbf16>, vector<64x32xbf16>, vector<2x32xf32> -> vector<2x32xf32>
    %20 = arith.addf %15, %19 : vector<2x32xf32>
    %21 = vector.extract_strided_slice %11 {offsets = [4, 0], sizes = [2, 64], strides = [1, 1]} : vector<16x64xbf16> to vector<2x64xbf16>
    %c2 = arith.constant 2 : index
    %c0_13 = arith.constant 0 : index
    %c0_14 = arith.constant 0 : index
    %22 = vector.load %arg3[%c2, %c0_13, %c0_14] : memref<8x64x32xbf16, #tpu.memory_space<vmem>>, vector<1x64x32xbf16>
    %23 = vector.shape_cast %22 : vector<1x64x32xbf16> to vector<64x32xbf16>
    %cst_15 = arith.constant dense<0.000000e+00> : vector<2x32xf32>
    %24 = tpu.matmul %21, %23, %cst_15 {dimension_numbers = #tpu.dot_dimension_numbers<[1], [0], [0], [1], [0, 0, 1, 1], [], []>} : vector<2x64xbf16>, vector<64x32xbf16>, vector<2x32xf32> -> vector<2x32xf32>
    %25 = arith.addf %20, %24 : vector<2x32xf32>
    %26 = vector.extract_strided_slice %11 {offsets = [6, 0], sizes = [2, 64], strides = [1, 1]} : vector<16x64xbf16> to vector<2x64xbf16>
    %c3 = arith.constant 3 : index
    %c0_16 = arith.constant 0 : index
    %c0_17 = arith.constant 0 : index
    %27 = vector.load %arg3[%c3, %c0_16, %c0_17] : memref<8x64x32xbf16, #tpu.memory_space<vmem>>, vector<1x64x32xbf16>
    %28 = vector.shape_cast %27 : vector<1x64x32xbf16> to vector<64x32xbf16>
    %cst_18 = arith.constant dense<0.000000e+00> : vector<2x32xf32>
    %29 = tpu.matmul %26, %28, %cst_18 {dimension_numbers = #tpu.dot_dimension_numbers<[1], [0], [0], [1], [0, 0, 1, 1], [], []>} : vector<2x64xbf16>, vector<64x32xbf16>, vector<2x32xf32> -> vector<2x32xf32>
    %30 = arith.addf %25, %29 : vector<2x32xf32>
    %31 = vector.extract_strided_slice %11 {offsets = [8, 0], sizes = [2, 64], strides = [1, 1]} : vector<16x64xbf16> to vector<2x64xbf16>
    %c4 = arith.constant 4 : index
    %c0_19 = arith.constant 0 : index
    %c0_20 = arith.constant 0 : index
    %32 = vector.load %arg3[%c4, %c0_19, %c0_20] : memref<8x64x32xbf16, #tpu.memory_space<vmem>>, vector<1x64x32xbf16>
    %33 = vector.shape_cast %32 : vector<1x64x32xbf16> to vector<64x32xbf16>
    %cst_21 = arith.constant dense<0.000000e+00> : vector<2x32xf32>
    %34 = tpu.matmul %31, %33, %cst_21 {dimension_numbers = #tpu.dot_dimension_numbers<[1], [0], [0], [1], [0, 0, 1, 1], [], []>} : vector<2x64xbf16>, vector<64x32xbf16>, vector<2x32xf32> -> vector<2x32xf32>
    %35 = arith.addf %30, %34 : vector<2x32xf32>
    %36 = vector.extract_strided_slice %11 {offsets = [10, 0], sizes = [2, 64], strides = [1, 1]} : vector<16x64xbf16> to vector<2x64xbf16>
    %c5 = arith.constant 5 : index
    %c0_22 = arith.constant 0 : index
    %c0_23 = arith.constant 0 : index
    %37 = vector.load %arg3[%c5, %c0_22, %c0_23] : memref<8x64x32xbf16, #tpu.memory_space<vmem>>, vector<1x64x32xbf16>
    %38 = vector.shape_cast %37 : vector<1x64x32xbf16> to vector<64x32xbf16>
    %cst_24 = arith.constant dense<0.000000e+00> : vector<2x32xf32>
    %39 = tpu.matmul %36, %38, %cst_24 {dimension_numbers = #tpu.dot_dimension_numbers<[1], [0], [0], [1], [0, 0, 1, 1], [], []>} : vector<2x64xbf16>, vector<64x32xbf16>, vector<2x32xf32> -> vector<2x32xf32>
    %40 = arith.addf %35, %39 : vector<2x32xf32>
    %41 = vector.extract_strided_slice %11 {offsets = [12, 0], sizes = [2, 64], strides = [1, 1]} : vector<16x64xbf16> to vector<2x64xbf16>
    %c6 = arith.constant 6 : index
    %c0_25 = arith.constant 0 : index
    %c0_26 = arith.constant 0 : index
    %42 = vector.load %arg3[%c6, %c0_25, %c0_26] : memref<8x64x32xbf16, #tpu.memory_space<vmem>>, vector<1x64x32xbf16>
    %43 = vector.shape_cast %42 : vector<1x64x32xbf16> to vector<64x32xbf16>
    %cst_27 = arith.constant dense<0.000000e+00> : vector<2x32xf32>
    %44 = tpu.matmul %41, %43, %cst_27 {dimension_numbers = #tpu.dot_dimension_numbers<[1], [0], [0], [1], [0, 0, 1, 1], [], []>} : vector<2x64xbf16>, vector<64x32xbf16>, vector<2x32xf32> -> vector<2x32xf32>
    %45 = arith.addf %40, %44 : vector<2x32xf32>
    %46 = vector.extract_strided_slice %11 {offsets = [14, 0], sizes = [2, 64], strides = [1, 1]} : vector<16x64xbf16> to vector<2x64xbf16>
    %c7 = arith.constant 7 : index
    %c0_28 = arith.constant 0 : index
    %c0_29 = arith.constant 0 : index
    %47 = vector.load %arg3[%c7, %c0_28, %c0_29] : memref<8x64x32xbf16, #tpu.memory_space<vmem>>, vector<1x64x32xbf16>
    %48 = vector.shape_cast %47 : vector<1x64x32xbf16> to vector<64x32xbf16>
    %cst_30 = arith.constant dense<0.000000e+00> : vector<2x32xf32>
    %49 = tpu.matmul %46, %48, %cst_30 {dimension_numbers = #tpu.dot_dimension_numbers<[1], [0], [0], [1], [0, 0, 1, 1], [], []>} : vector<2x64xbf16>, vector<64x32xbf16>, vector<2x32xf32> -> vector<2x32xf32>
    %50 = arith.addf %45, %49 : vector<2x32xf32>
    %c0_31 = arith.constant 0 : index
    %c0_32 = arith.constant 0 : index
    %51 = vector.load %arg4[%c0_31, %c0_32] : memref<1x32xf32, #tpu.memory_space<vmem>>, vector<1x32xf32>
    %52 = vector.broadcast %51 : vector<1x32xf32> to vector<2x32xf32>
    %53 = arith.addf %50, %52 : vector<2x32xf32>
    %cst_33 = arith.constant 0.000000e+00 : f32
    %54 = vector.broadcast %cst_33 : f32 to vector<2x32xf32>
    %55 = arith.maximumf %53, %54 : vector<2x32xf32>
    %56 = arith.truncf %55 : vector<2x32xf32> to vector<2x32xbf16>
    %c0_34 = arith.constant 0 : index
    %c0_35 = arith.constant 0 : index
    %57 = vector.load %arg5[%c0_34, %c0_35] : memref<32x32xbf16, #tpu.memory_space<vmem>>, vector<32x32xbf16>
    %cst_36 = arith.constant dense<0.000000e+00> : vector<2x32xf32>
    %58 = tpu.matmul %56, %57, %cst_36 {dimension_numbers = #tpu.dot_dimension_numbers<[1], [0], [0], [1], [0, 0, 1, 1], [], []>} : vector<2x32xbf16>, vector<32x32xbf16>, vector<2x32xf32> -> vector<2x32xf32>
    %c0_37 = arith.constant 0 : index
    %c0_38 = arith.constant 0 : index
    %59 = vector.load %arg6[%c0_37, %c0_38] : memref<1x32xf32, #tpu.memory_space<vmem>>, vector<1x32xf32>
    %60 = vector.broadcast %59 : vector<1x32xf32> to vector<2x32xf32>
    %61 = arith.addf %58, %60 : vector<2x32xf32>
    %cst_39 = arith.constant 0.000000e+00 : f32
    %62 = vector.broadcast %cst_39 : f32 to vector<2x32xf32>
    %63 = arith.maximumf %61, %62 : vector<2x32xf32>
    %64 = arith.truncf %63 : vector<2x32xf32> to vector<2x32xbf16>
    %c0_40 = arith.constant 0 : index
    %c0_41 = arith.constant 0 : index
    %65 = vector.load %arg7[%c0_40, %c0_41] : memref<32x128xbf16, #tpu.memory_space<vmem>>, vector<32x128xbf16>
    %cst_42 = arith.constant dense<0.000000e+00> : vector<2x128xf32>
    %66 = tpu.matmul %64, %65, %cst_42 {dimension_numbers = #tpu.dot_dimension_numbers<[1], [0], [0], [1], [0, 0, 1, 1], [], []>} : vector<2x32xbf16>, vector<32x128xbf16>, vector<2x128xf32> -> vector<2x128xf32>
    %c0_43 = arith.constant 0 : index
    %c0_44 = arith.constant 0 : index
    %67 = vector.load %arg8[%c0_43, %c0_44] : memref<1x128xf32, #tpu.memory_space<vmem>>, vector<1x128xf32>
    %68 = vector.broadcast %67 : vector<1x128xf32> to vector<2x128xf32>
    %69 = arith.addf %66, %68 : vector<2x128xf32>
    %c0_45 = arith.constant 0 : index
    %c0_46 = arith.constant 0 : index
    %70 = vector.load %arg9[%c0_45, %c0_46] : memref<2x128xf32, #tpu.memory_space<vmem>>, vector<2x128xf32>
    tpu.vector_store %arg9[%c0_45, %c0_46], %69 {strides = array<i32>} : memref<2x128xf32, #tpu.memory_space<vmem>>, vector<2x128xf32>,
    return
  }
}

</mosaic_0001>

<llo_original>
// kernel: cnn_forward.1
$region0: #{cnn_forward.1}
  #allocation0 [shape = 'u32[]', space=smem, size = 0x4, offset = 0x4, fixed_abs, tag = 'smem constant byte address 0x4 - core index']
  #allocation1 [shape = 'u32[144,128]{1,0:T(1,128)}', space=vmem, size = 0x12000, scoped, tag = 'internal scratch']
  %s0 = inlined_call_operand.vmem [shape: bf16[32,48], index: 0, kind: input, shape index: {}]
  %s1 = inlined_call_operand.vmem [shape: bf16[48,64], index: 1, kind: input, shape index: {}]
  %s2 = inlined_call_operand.vmem [shape: f32[1,64], index: 2, kind: input, shape index: {}]
  %s3 = inlined_call_operand.vmem [shape: bf16[8,64,32], index: 3, kind: input, shape index: {}]
  %s4 = inlined_call_operand.vmem [shape: f32[1,32], index: 4, kind: input, shape index: {}]
  %s5 = inlined_call_operand.vmem [shape: bf16[32,32], index: 5, kind: input, shape index: {}]
  %s6 = inlined_call_operand.vmem [shape: f32[1,32], index: 6, kind: input, shape index: {}]
  %s7 = inlined_call_operand.vmem [shape: bf16[32,128], index: 7, kind: input, shape index: {}]
  %s8 = inlined_call_operand.vmem [shape: f32[1,128], index: 8, kind: input, shape index: {}]
  %s9 = inlined_call_operand.hbm [shape: f32[2,128], index: 9, kind: output, shape index: {}]
  %s10 = sld [smem:[#allocation0]]
  $region46: #{cnn_forward.1} parent=0
    _
  %s12 = ssub.s32 1, %s10
  %s13 = scalar_select 0, %s12, %s10
  $region1: #{cnn_forward.1} parent=0
    #allocation2 [shape = 'u8[1024]{0}', space=vmem, size = 0x400, scoped, tag = 'output window, operand 0, single buffered']
    #allocation3 [shape = 's32[1]{0}', space=sflag, size = 0x4, scoped, tag = 'scoped memory for cnn_forward.1']
    %14 = vsyncpa [#allocation3], 0
    // Predicated region
    $region2: #{cnn_forward.1} parent=1 // pred_check
      _
    $region3: #{cnn_forward.1} parent=1 // pred_check_branch
      %16 = sbr.rel (0) target = $region5
    $region4: #{cnn_forward.1} parent=1 // pred_region
      _
    $region5: #{cnn_forward.1} parent=1 // pred_fallthru
      _
    // Predicated region
    $region6: #{cnn_forward.1} parent=1 // pred_check
      _
    $region7: #{cnn_forward.1} parent=1 // pred_check_branch
      %18 = sbr.rel (0) target = $region9
    $region8: #{cnn_forward.1} parent=1 // pred_region
      _
    $region9: #{cnn_forward.1} parent=1 // pred_fallthru
      _
    // Predicated region
    $region10: #{cnn_forward.1} parent=1 // pred_check
      _
    $region11: #{cnn_forward.1} parent=1 // pred_check_branch
      %20 = sbr.rel (0) target = $region13
    $region12: #{cnn_forward.1} parent=1 // pred_region
      _
    $region13: #{cnn_forward.1} parent=1 // pred_fallthru
      _
    // Predicated region
    $region14: #{cnn_forward.1} parent=1 // pred_check
      _
    $region15: #{cnn_forward.1} parent=1 // pred_check_branch
      %22 = sbr.rel (0) target = $region17
    $region16: #{cnn_forward.1} parent=1 // pred_region
      _
    $region17: #{cnn_forward.1} parent=1 // pred_fallthru
      _
    // Predicated region
    $region18: #{cnn_forward.1} parent=1 // pred_check
      _
    $region19: #{cnn_forward.1} parent=1 // pred_check_branch
      %24 = sbr.rel (0) target = $region21
    $region20: #{cnn_forward.1} parent=1 // pred_region
      _
    $region21: #{cnn_forward.1} parent=1 // pred_fallthru
      _
    // Predicated region
    $region22: #{cnn_forward.1} parent=1 // pred_check
      _
    $region23: #{cnn_forward.1} parent=1 // pred_check_branch
      %26 = sbr.rel (0) target = $region25
    $region24: #{cnn_forward.1} parent=1 // pred_region
      _
    $region25: #{cnn_forward.1} parent=1 // pred_fallthru
      _
    // Predicated region
    $region26: #{cnn_forward.1} parent=1 // pred_check
      _
    $region27: #{cnn_forward.1} parent=1 // pred_check_branch
      %28 = sbr.rel (0) target = $region29
    $region28: #{cnn_forward.1} parent=1 // pred_region
      _
    $region29: #{cnn_forward.1} parent=1 // pred_fallthru
      _
    // Predicated region
    $region30: #{cnn_forward.1} parent=1 // pred_check
      _
    $region31: #{cnn_forward.1} parent=1 // pred_check_branch
      %30 = sbr.rel (0) target = $region33
    $region32: #{cnn_forward.1} parent=1 // pred_region
      _
    $region33: #{cnn_forward.1} parent=1 // pred_fallthru
      _
    // Predicated region
    $region34: #{cnn_forward.1} parent=1 // pred_check
      _
    $region35: #{cnn_forward.1} parent=1 // pred_check_branch
      %32 = sbr.rel (0) target = $region37
    $region36: #{cnn_forward.1} parent=1 // pred_region
      _
    $region37: #{cnn_forward.1} parent=1 // pred_fallthru
      _
    %v34 = vld [vmem:[%s0] sm:$0xf]
    %v35 = vld [vmem:[%s0 + $0x4] sm:$0xf]
    %v36 = vld [vmem:[%s0 + $0x8] sm:$0xf]
    %v37 = vld [vmem:[%s0 + $0xc] sm:$0xf]
    %v38 = vld [vmem:[%s1] sm:$0xf]
    %v39 = vld [vmem:[%s1 + $0x4] sm:$0xf]
    %v40 = vld [vmem:[%s1 + $0x8] sm:$0xf]
    %v41 = vld [vmem:[%s1 + $0xc] sm:$0xf]
    %v42 = vld [vmem:[%s1 + $0x10] sm:$0xf]
    %v43 = vld [vmem:[%s1 + $0x14] sm:$0xf]
    %v48 = vunpack.c.l.b16 %v34
    %v49 = vunpack.c.l.b16 %v35
    %v50 = vunpack.c.l.b16 %v36
    %v51 = vunpack.c.l.b16 %v37
    %v52 = vpack.c.b16 %v49, %v48
    %v53 = vpack.c.b16 %v51, %v50
    %v60 = vunpack.c.l.b16 %v38
    %v61 = vunpack.c.l.b16 %v39
    %v62 = vunpack.c.l.b16 %v40
    %v63 = vunpack.c.l.b16 %v41
    %v64 = vunpack.c.l.b16 %v42
    %v65 = vunpack.c.l.b16 %v43
    %v66 = vpack.c.b16 %v61, %v60
    %v67 = vpack.c.b16 %v63, %v62
    %v68 = vpack.c.b16 %v65, %v64
    %vm72 = vcmask 392192
    %v74 = vsel %vm72, %v52, 0
    %v77 = vsel %vm72, %v53, 0
    %79 = vmatprep.subr.bf16.mxu0 0
    %80 = vmatpush1.bf16.msra.mxu0 0
    %81 = vmatprep.subr.bf16.mxu0 0
    %82 = vmatpush1.bf16.msra.mxu0 0
    %83 = vmatprep.subr.bf16.mxu0 0
    %84 = vmatpush1.bf16.msra.mxu0 0
    %85 = vmatprep.subr.bf16.mxu0 0
    %86 = vmatpush1.bf16.msra.mxu0 0
    %87 = vmatprep.subr.bf16.mxu0 0
    %88 = vmatpush1.bf16.msra.mxu0 0
    %89 = vmatprep.subr.bf16.mxu0 0
    %90 = vmatpush1.bf16.msra.mxu0 %v68
    %91 = vmatprep.subr.bf16.mxu0 0
    %92 = vmatpush1.bf16.msra.mxu0 %v67
    %93 = vmatprep.subr.bf16.mxu0 0
    %94 = vmatpush1.bf16.msra.mxu0 %v66
    %95 = vmatprep.subr.bf16.mxu0 0
    %96 = vmatpush2.bf16.msra.mxu0 0
    %97 = vmatprep.subr.bf16.mxu0 0
    %98 = vmatpush2.bf16.msra.mxu0 0
    %99 = vmatprep.subr.bf16.mxu0 0
    %100 = vmatpush2.bf16.msra.mxu0 0
    %101 = vmatprep.subr.bf16.mxu0 0
    %102 = vmatpush2.bf16.msra.mxu0 0
    %103 = vmatprep.subr.bf16.mxu0 0
    %104 = vmatpush2.bf16.msra.mxu0 0
    %105 = vmatprep.subr.bf16.mxu0 0
    %106 = vmatpush2.bf16.msra.mxu0 0
    %107 = vmatprep.subr.bf16.mxu0 0
    %108 = vmatpush2.bf16.msra.mxu0 0
    %109 = vmatprep.subr.bf16.mxu0 0
    %110 = vmatpush2.bf16.msra.mxu0 0
    %111 = vmatprep.mubr.bf16.mxu0 0
    %112 = vmatmul.mubr.bf16.gmra.mxu0 %v74
    %v113 = vpop.f32.mrf.mxu0
    %v114 = vadd.f32 0.0, %v113
    %v115 = vpop.f32.mrf.mxu0
    %v116 = vpop.f32.mrf.mxu0
    %v117 = vadd.f32 0.0, %v116
    %v118 = vpop.f32.mrf.mxu0
    %119 = vmatprep.mubr.bf16.mxu0 0
    %120 = vmatmul.mubr.bf16.gmra.mxu0 %v77
    %v121 = vpop.f32.mrf.mxu0
    %v122 = vadd.f32 0.0, %v121
    %v123 = vpop.f32.mrf.mxu0
    %v124 = vpop.f32.mrf.mxu0
    %v125 = vadd.f32 0.0, %v124
    %v126 = vpop.f32.mrf.mxu0
    %127 = vdwg.mxu0
    %v128 = vmax.f32 %v114, %v122
    %v129 = vmax.f32 %v117, %v125
    %v130 = vld [vmem:[%s2] sm:$0x1]
    %v132 = vlaneseq
    %v133 = vshrl.u32 %v132, 7
    %v134 = vsub.s32 0, %v133
    %v135 = vrot.slane %v130, %v134
    %v137 = vadd.f32 %v128, %v135
    %v138 = vadd.f32 %v129, %v135
    %v139 = vmax.f32 %v137, 0.0
    %v140 = vmax.f32 %v138, 0.0
    %v141 = vpack.c.bf16 %v140, %v139
    %v142 = vld [vmem:[%s3] sm:$0xf]
    %v143 = vld [vmem:[%s3 + $0x4] sm:$0xf]
    %v144 = vld [vmem:[%s3 + $0x8] sm:$0xf]
    %v145 = vld [vmem:[%s3 + $0xc] sm:$0xf]
    %v146 = vld [vmem:[%s3 + $0x10] sm:$0xf]
    %v147 = vld [vmem:[%s3 + $0x14] sm:$0xf]
    %v148 = vld [vmem:[%s3 + $0x18] sm:$0xf]
    %v149 = vld [vmem:[%s3 + $0x1c] sm:$0xf]
    %s150 = scalar_lea.vmem %s3, 32
    %v151 = vld [vmem:[%s150] sm:$0xf]
    %v152 = vld [vmem:[%s150 + $0x4] sm:$0xf]
    %v153 = vld [vmem:[%s150 + $0x8] sm:$0xf]
    %v154 = vld [vmem:[%s150 + $0xc] sm:$0xf]
    %v155 = vld [vmem:[%s150 + $0x10] sm:$0xf]
    %v156 = vld [vmem:[%s150 + $0x14] sm:$0xf]
    %v157 = vld [vmem:[%s150 + $0x18] sm:$0xf]
    %v158 = vld [vmem:[%s150 + $0x1c] sm:$0xf]
    %v160 = vrot.slane %v141, 1
    %v169 = vunpack.c.l.b16 %v151
    %v170 = vunpack.c.l.b16 %v152
    %v171 = vunpack.c.l.b16 %v153
    %v172 = vunpack.c.l.b16 %v154
    %v173 = vunpack.c.l.b16 %v155
    %v174 = vunpack.c.l.b16 %v156
    %v175 = vunpack.c.l.b16 %v157
    %v176 = vunpack.c.l.b16 %v158
    %v177 = vpack.c.b16 %v170, %v169
    %v178 = vpack.c.b16 %v172, %v171
    %v179 = vpack.c.b16 %v174, %v173
    %v180 = vpack.c.b16 %v176, %v175
    %vm185 = vcmask 523264
    %v187 = vsel %vm185, %v160, 0
    %189 = vmatprep.subr.bf16.mxu0 0
    %190 = vmatpush1.bf16.msra.mxu0 0
    %191 = vmatprep.subr.bf16.mxu0 0
    %192 = vmatpush1.bf16.msra.mxu0 0
    %193 = vmatprep.subr.bf16.mxu0 0
    %194 = vmatpush1.bf16.msra.mxu0 0
    %195 = vmatprep.subr.bf16.mxu0 0
    %196 = vmatpush1.bf16.msra.mxu0 0
    %197 = vmatprep.subr.bf16.mxu0 0
    %198 = vmatpush1.bf16.msra.mxu0 %v180
    %199 = vmatprep.subr.bf16.mxu0 0
    %200 = vmatpush1.bf16.msra.mxu0 %v179
    %201 = vmatprep.subr.bf16.mxu0 0
    %202 = vmatpush1.bf16.msra.mxu0 %v178
    %203 = vmatprep.subr.bf16.mxu0 0
    %204 = vmatpush1.bf16.msra.mxu0 %v177
    %205 = vmatprep.subr.bf16.mxu0 0
    %206 = vmatpush2.bf16.msra.mxu0 0
    %207 = vmatprep.subr.bf16.mxu0 0
    %208 = vmatpush2.bf16.msra.mxu0 0
    %209 = vmatprep.subr.bf16.mxu0 0
    %210 = vmatpush2.bf16.msra.mxu0 0
    %211 = vmatprep.subr.bf16.mxu0 0
    %212 = vmatpush2.bf16.msra.mxu0 0
    %213 = vmatprep.subr.bf16.mxu0 0
    %214 = vmatpush2.bf16.msra.mxu0 0
    %215 = vmatprep.subr.bf16.mxu0 0
    %216 = vmatpush2.bf16.msra.mxu0 0
    %217 = vmatprep.subr.bf16.mxu0 0
    %218 = vmatpush2.bf16.msra.mxu0 0
    %219 = vmatprep.subr.bf16.mxu0 0
    %220 = vmatpush2.bf16.msra.mxu0 0
    %221 = vmatprep.mubr.bf16.mxu0 0
    %222 = vmatmul.mubr.bf16.gmra.mxu0 %v187
    %v223 = vpop.f32.mrf.mxu0
    %v224 = vadd.f32 0.0, %v223
    %v225 = vpop.f32.mrf.mxu0
    %v226 = vpop.f32.mrf.mxu0
    %v227 = vpop.f32.mrf.mxu0
    %228 = vdwg.mxu0
    %v237 = vunpack.c.l.b16 %v142
    %v238 = vunpack.c.l.b16 %v143
    %v239 = vunpack.c.l.b16 %v144
    %v240 = vunpack.c.l.b16 %v145
    %v241 = vunpack.c.l.b16 %v146
    %v242 = vunpack.c.l.b16 %v147
    %v243 = vunpack.c.l.b16 %v148
    %v244 = vunpack.c.l.b16 %v149
    %v245 = vpack.c.b16 %v238, %v237
    %v246 = vpack.c.b16 %v240, %v239
    %v247 = vpack.c.b16 %v242, %v241
    %v248 = vpack.c.b16 %v244, %v243
    %v254 = vsel %vm185, %v141, 0
    %256 = vmatprep.subr.bf16.mxu0 0
    %257 = vmatpush1.bf16.msra.mxu0 0
    %258 = vmatprep.subr.bf16.mxu0 0
    %259 = vmatpush1.bf16.msra.mxu0 0
    %260 = vmatprep.subr.bf16.mxu0 0
    %261 = vmatpush1.bf16.msra.mxu0 0
    %262 = vmatprep.subr.bf16.mxu0 0
    %263 = vmatpush1.bf16.msra.mxu0 0
    %264 = vmatprep.subr.bf16.mxu0 0
    %265 = vmatpush1.bf16.msra.mxu0 %v248
    %266 = vmatprep.subr.bf16.mxu0 0
    %267 = vmatpush1.bf16.msra.mxu0 %v247
    %268 = vmatprep.subr.bf16.mxu0 0
    %269 = vmatpush1.bf16.msra.mxu0 %v246
    %270 = vmatprep.subr.bf16.mxu0 0
    %271 = vmatpush1.bf16.msra.mxu0 %v245
    %272 = vmatprep.subr.bf16.mxu0 0
    %273 = vmatpush2.bf16.msra.mxu0 0
    %274 = vmatprep.subr.bf16.mxu0 0
    %275 = vmatpush2.bf16.msra.mxu0 0
    %276 = vmatprep.subr.bf16.mxu0 0
    %277 = vmatpush2.bf16.msra.mxu0 0
    %278 = vmatprep.subr.bf16.mxu0 0
    %279 = vmatpush2.bf16.msra.mxu0 0
    %280 = vmatprep.subr.bf16.mxu0 0
    %281 = vmatpush2.bf16.msra.mxu0 0
    %282 = vmatprep.subr.bf16.mxu0 0
    %283 = vmatpush2.bf16.msra.mxu0 0
    %284 = vmatprep.subr.bf16.mxu0 0
    %285 = vmatpush2.bf16.msra.mxu0 0
    %286 = vmatprep.subr.bf16.mxu0 0
    %287 = vmatpush2.bf16.msra.mxu0 0
    %288 = vmatprep.mubr.bf16.mxu0 0
    %289 = vmatmul.mubr.bf16.gmra.mxu0 %v254
    %v290 = vpop.f32.mrf.mxu0
    %v291 = vadd.f32 %v224, %v290
    %v292 = vpop.f32.mrf.mxu0
    %v293 = vpop.f32.mrf.mxu0
    %v294 = vpop.f32.mrf.mxu0
    %295 = vdwg.mxu0
    %s296 = scalar_lea.vmem %s3, 64
    %v297 = vld [vmem:[%s296] sm:$0xf]
    %v298 = vld [vmem:[%s296 + $0x4] sm:$0xf]
    %v299 = vld [vmem:[%s296 + $0x8] sm:$0xf]
    %v300 = vld [vmem:[%s296 + $0xc] sm:$0xf]
    %v301 = vld [vmem:[%s296 + $0x10] sm:$0xf]
    %v302 = vld [vmem:[%s296 + $0x14] sm:$0xf]
    %v303 = vld [vmem:[%s296 + $0x18] sm:$0xf]
    %v304 = vld [vmem:[%s296 + $0x1c] sm:$0xf]
    %v305 = vrot.slane %v141, 2
    %v314 = vunpack.c.l.b16 %v297
    %v315 = vunpack.c.l.b16 %v298
    %v316 = vunpack.c.l.b16 %v299
    %v317 = vunpack.c.l.b16 %v300
    %v318 = vunpack.c.l.b16 %v301
    %v319 = vunpack.c.l.b16 %v302
    %v320 = vunpack.c.l.b16 %v303
    %v321 = vunpack.c.l.b16 %v304
    %v322 = vpack.c.b16 %v315, %v314
    %v323 = vpack.c.b16 %v317, %v316
    %v324 = vpack.c.b16 %v319, %v318
    %v325 = vpack.c.b16 %v321, %v320
    %v331 = vsel %vm185, %v305, 0
    %333 = vmatprep.subr.bf16.mxu0 0
    %334 = vmatpush1.bf16.msra.mxu0 0
    %335 = vmatprep.subr.bf16.mxu0 0
    %336 = vmatpush1.bf16.msra.mxu0 0
    %337 = vmatprep.subr.bf16.mxu0 0
    %338 = vmatpush1.bf16.msra.mxu0 0
    %339 = vmatprep.subr.bf16.mxu0 0
    %340 = vmatpush1.bf16.msra.mxu0 0
    %341 = vmatprep.subr.bf16.mxu0 0
    %342 = vmatpush1.bf16.msra.mxu0 %v325
    %343 = vmatprep.subr.bf16.mxu0 0
    %344 = vmatpush1.bf16.msra.mxu0 %v324
    %345 = vmatprep.subr.bf16.mxu0 0
    %346 = vmatpush1.bf16.msra.mxu0 %v323
    %347 = vmatprep.subr.bf16.mxu0 0
    %348 = vmatpush1.bf16.msra.mxu0 %v322
    %349 = vmatprep.subr.bf16.mxu0 0
    %350 = vmatpush2.bf16.msra.mxu0 0
    %351 = vmatprep.subr.bf16.mxu0 0
    %352 = vmatpush2.bf16.msra.mxu0 0
    %353 = vmatprep.subr.bf16.mxu0 0
    %354 = vmatpush2.bf16.msra.mxu0 0
    %355 = vmatprep.subr.bf16.mxu0 0
    %356 = vmatpush2.bf16.msra.mxu0 0
    %357 = vmatprep.subr.bf16.mxu0 0
    %358 = vmatpush2.bf16.msra.mxu0 0
    %359 = vmatprep.subr.bf16.mxu0 0
    %360 = vmatpush2.bf16.msra.mxu0 0
    %361 = vmatprep.subr.bf16.mxu0 0
    %362 = vmatpush2.bf16.msra.mxu0 0
    %363 = vmatprep.subr.bf16.mxu0 0
    %364 = vmatpush2.bf16.msra.mxu0 0
    %365 = vmatprep.mubr.bf16.mxu0 0
    %366 = vmatmul.mubr.bf16.gmra.mxu0 %v331
    %v367 = vpop.f32.mrf.mxu0
    %v368 = vadd.f32 0.0, %v367
    %v369 = vpop.f32.mrf.mxu0
    %v370 = vpop.f32.mrf.mxu0
    %v371 = vpop.f32.mrf.mxu0
    %372 = vdwg.mxu0
    %v373 = vadd.f32 %v291, %v368
    %s374 = scalar_lea.vmem %s3, 96
    %v375 = vld [vmem:[%s374] sm:$0xf]
    %v376 = vld [vmem:[%s374 + $0x4] sm:$0xf]
    %v377 = vld [vmem:[%s374 + $0x8] sm:$0xf]
    %v378 = vld [vmem:[%s374 + $0xc] sm:$0xf]
    %v379 = vld [vmem:[%s374 + $0x10] sm:$0xf]
    %v380 = vld [vmem:[%s374 + $0x14] sm:$0xf]
    %v381 = vld [vmem:[%s374 + $0x18] sm:$0xf]
    %v382 = vld [vmem:[%s374 + $0x1c] sm:$0xf]
    %v383 = vrot.slane %v141, 3
    %v392 = vunpack.c.l.b16 %v375
    %v393 = vunpack.c.l.b16 %v376
    %v394 = vunpack.c.l.b16 %v377
    %v395 = vunpack.c.l.b16 %v378
    %v396 = vunpack.c.l.b16 %v379
    %v397 = vunpack.c.l.b16 %v380
    %v398 = vunpack.c.l.b16 %v381
    %v399 = vunpack.c.l.b16 %v382
    %v400 = vpack.c.b16 %v393, %v392
    %v401 = vpack.c.b16 %v395, %v394
    %v402 = vpack.c.b16 %v397, %v396
    %v403 = vpack.c.b16 %v399, %v398
    %v409 = vsel %vm185, %v383, 0
    %411 = vmatprep.subr.bf16.mxu0 0
    %412 = vmatpush1.bf16.msra.mxu0 0
    %413 = vmatprep.subr.bf16.mxu0 0
    %414 = vmatpush1.bf16.msra.mxu0 0
    %415 = vmatprep.subr.bf16.mxu0 0
    %416 = vmatpush1.bf16.msra.mxu0 0
    %417 = vmatprep.subr.bf16.mxu0 0
    %418 = vmatpush1.bf16.msra.mxu0 0
    %419 = vmatprep.subr.bf16.mxu0 0
    %420 = vmatpush1.bf16.msra.mxu0 %v403
    %421 = vmatprep.subr.bf16.mxu0 0
    %422 = vmatpush1.bf16.msra.mxu0 %v402
    %423 = vmatprep.subr.bf16.mxu0 0
    %424 = vmatpush1.bf16.msra.mxu0 %v401
    %425 = vmatprep.subr.bf16.mxu0 0
    %426 = vmatpush1.bf16.msra.mxu0 %v400
    %427 = vmatprep.subr.bf16.mxu0 0
    %428 = vmatpush2.bf16.msra.mxu0 0
    %429 = vmatprep.subr.bf16.mxu0 0
    %430 = vmatpush2.bf16.msra.mxu0 0
    %431 = vmatprep.subr.bf16.mxu0 0
    %432 = vmatpush2.bf16.msra.mxu0 0
    %433 = vmatprep.subr.bf16.mxu0 0
    %434 = vmatpush2.bf16.msra.mxu0 0
    %435 = vmatprep.subr.bf16.mxu0 0
    %436 = vmatpush2.bf16.msra.mxu0 0
    %437 = vmatprep.subr.bf16.mxu0 0
    %438 = vmatpush2.bf16.msra.mxu0 0
    %439 = vmatprep.subr.bf16.mxu0 0
    %440 = vmatpush2.bf16.msra.mxu0 0
    %441 = vmatprep.subr.bf16.mxu0 0
    %442 = vmatpush2.bf16.msra.mxu0 0
    %443 = vmatprep.mubr.bf16.mxu0 0
    %444 = vmatmul.mubr.bf16.gmra.mxu0 %v409
    %v445 = vpop.f32.mrf.mxu0
    %v446 = vadd.f32 0.0, %v445
    %v447 = vpop.f32.mrf.mxu0
    %v448 = vpop.f32.mrf.mxu0
    %v449 = vpop.f32.mrf.mxu0
    %450 = vdwg.mxu0
    %v451 = vadd.f32 %v373, %v446
    %s452 = scalar_lea.vmem %s3, 128
    %v453 = vld [vmem:[%s452] sm:$0xf]
    %v454 = vld [vmem:[%s452 + $0x4] sm:$0xf]
    %v455 = vld [vmem:[%s452 + $0x8] sm:$0xf]
    %v456 = vld [vmem:[%s452 + $0xc] sm:$0xf]
    %v457 = vld [vmem:[%s452 + $0x10] sm:$0xf]
    %v458 = vld [vmem:[%s452 + $0x14] sm:$0xf]
    %v459 = vld [vmem:[%s452 + $0x18] sm:$0xf]
    %v460 = vld [vmem:[%s452 + $0x1c] sm:$0xf]
    %v461 = vrot.slane %v141, 4
    %v470 = vunpack.c.l.b16 %v453
    %v471 = vunpack.c.l.b16 %v454
    %v472 = vunpack.c.l.b16 %v455
    %v473 = vunpack.c.l.b16 %v456
    %v474 = vunpack.c.l.b16 %v457
    %v475 = vunpack.c.l.b16 %v458
    %v476 = vunpack.c.l.b16 %v459
    %v477 = vunpack.c.l.b16 %v460
    %v478 = vpack.c.b16 %v471, %v470
    %v479 = vpack.c.b16 %v473, %v472
    %v480 = vpack.c.b16 %v475, %v474
    %v481 = vpack.c.b16 %v477, %v476
    %v487 = vsel %vm185, %v461, 0
    %489 = vmatprep.subr.bf16.mxu0 0
    %490 = vmatpush1.bf16.msra.mxu0 0
    %491 = vmatprep.subr.bf16.mxu0 0
    %492 = vmatpush1.bf16.msra.mxu0 0
    %493 = vmatprep.subr.bf16.mxu0 0
    %494 = vmatpush1.bf16.msra.mxu0 0
    %495 = vmatprep.subr.bf16.mxu0 0
    %496 = vmatpush1.bf16.msra.mxu0 0
    %497 = vmatprep.subr.bf16.mxu0 0
    %498 = vmatpush1.bf16.msra.mxu0 %v481
    %499 = vmatprep.subr.bf16.mxu0 0
    %500 = vmatpush1.bf16.msra.mxu0 %v480
    %501 = vmatprep.subr.bf16.mxu0 0
    %502 = vmatpush1.bf16.msra.mxu0 %v479
    %503 = vmatprep.subr.bf16.mxu0 0
    %504 = vmatpush1.bf16.msra.mxu0 %v478
    %505 = vmatprep.subr.bf16.mxu0 0
    %506 = vmatpush2.bf16.msra.mxu0 0
    %507 = vmatprep.subr.bf16.mxu0 0
    %508 = vmatpush2.bf16.msra.mxu0 0
    %509 = vmatprep.subr.bf16.mxu0 0
    %510 = vmatpush2.bf16.msra.mxu0 0
    %511 = vmatprep.subr.bf16.mxu0 0
    %512 = vmatpush2.bf16.msra.mxu0 0
    %513 = vmatprep.subr.bf16.mxu0 0
    %514 = vmatpush2.bf16.msra.mxu0 0
    %515 = vmatprep.subr.bf16.mxu0 0
    %516 = vmatpush2.bf16.msra.mxu0 0
    %517 = vmatprep.subr.bf16.mxu0 0
    %518 = vmatpush2.bf16.msra.mxu0 0
    %519 = vmatprep.subr.bf16.mxu0 0
    %520 = vmatpush2.bf16.msra.mxu0 0
    %521 = vmatprep.mubr.bf16.mxu0 0
    %522 = vmatmul.mubr.bf16.gmra.mxu0 %v487
    %v523 = vpop.f32.mrf.mxu0
    %v524 = vadd.f32 0.0, %v523
    %v525 = vpop.f32.mrf.mxu0
    %v526 = vpop.f32.mrf.mxu0
    %v527 = vpop.f32.mrf.mxu0
    %528 = vdwg.mxu0
    %v529 = vadd.f32 %v451, %v524
    %s530 = scalar_lea.vmem %s3, 160
    %v531 = vld [vmem:[%s530] sm:$0xf]
    %v532 = vld [vmem:[%s530 + $0x4] sm:$0xf]
    %v533 = vld [vmem:[%s530 + $0x8] sm:$0xf]
    %v534 = vld [vmem:[%s530 + $0xc] sm:$0xf]
    %v535 = vld [vmem:[%s530 + $0x10] sm:$0xf]
    %v536 = vld [vmem:[%s530 + $0x14] sm:$0xf]
    %v537 = vld [vmem:[%s530 + $0x18] sm:$0xf]
    %v538 = vld [vmem:[%s530 + $0x1c] sm:$0xf]
    %v539 = vrot.slane %v141, 5
    %v548 = vunpack.c.l.b16 %v531
    %v549 = vunpack.c.l.b16 %v532
    %v550 = vunpack.c.l.b16 %v533
    %v551 = vunpack.c.l.b16 %v534
    %v552 = vunpack.c.l.b16 %v535
    %v553 = vunpack.c.l.b16 %v536
    %v554 = vunpack.c.l.b16 %v537
    %v555 = vunpack.c.l.b16 %v538
    %v556 = vpack.c.b16 %v549, %v548
    %v557 = vpack.c.b16 %v551, %v550
    %v558 = vpack.c.b16 %v553, %v552
    %v559 = vpack.c.b16 %v555, %v554
    %v565 = vsel %vm185, %v539, 0
    %567 = vmatprep.subr.bf16.mxu0 0
    %568 = vmatpush1.bf16.msra.mxu0 0
    %569 = vmatprep.subr.bf16.mxu0 0
    %570 = vmatpush1.bf16.msra.mxu0 0
    %571 = vmatprep.subr.bf16.mxu0 0
    %572 = vmatpush1.bf16.msra.mxu0 0
    %573 = vmatprep.subr.bf16.mxu0 0
    %574 = vmatpush1.bf16.msra.mxu0 0
    %575 = vmatprep.subr.bf16.mxu0 0
    %576 = vmatpush1.bf16.msra.mxu0 %v559
    %577 = vmatprep.subr.bf16.mxu0 0
    %578 = vmatpush1.bf16.msra.mxu0 %v558
    %579 = vmatprep.subr.bf16.mxu0 0
    %580 = vmatpush1.bf16.msra.mxu0 %v557
    %581 = vmatprep.subr.bf16.mxu0 0
    %582 = vmatpush1.bf16.msra.mxu0 %v556
    %583 = vmatprep.subr.bf16.mxu0 0
    %584 = vmatpush2.bf16.msra.mxu0 0
    %585 = vmatprep.subr.bf16.mxu0 0
    %586 = vmatpush2.bf16.msra.mxu0 0
    %587 = vmatprep.subr.bf16.mxu0 0
    %588 = vmatpush2.bf16.msra.mxu0 0
    %589 = vmatprep.subr.bf16.mxu0 0
    %590 = vmatpush2.bf16.msra.mxu0 0
    %591 = vmatprep.subr.bf16.mxu0 0
    %592 = vmatpush2.bf16.msra.mxu0 0
    %593 = vmatprep.subr.bf16.mxu0 0
    %594 = vmatpush2.bf16.msra.mxu0 0
    %595 = vmatprep.subr.bf16.mxu0 0
    %596 = vmatpush2.bf16.msra.mxu0 0
    %597 = vmatprep.subr.bf16.mxu0 0
    %598 = vmatpush2.bf16.msra.mxu0 0
    %599 = vmatprep.mubr.bf16.mxu0 0
    %600 = vmatmul.mubr.bf16.gmra.mxu0 %v565
    %v601 = vpop.f32.mrf.mxu0
    %v602 = vadd.f32 0.0, %v601
    %v603 = vpop.f32.mrf.mxu0
    %v604 = vpop.f32.mrf.mxu0
    %v605 = vpop.f32.mrf.mxu0
    %606 = vdwg.mxu0
    %v607 = vadd.f32 %v529, %v602
    %s608 = scalar_lea.vmem %s3, 192
    %v609 = vld [vmem:[%s608] sm:$0xf]
    %v610 = vld [vmem:[%s608 + $0x4] sm:$0xf]
    %v611 = vld [vmem:[%s608 + $0x8] sm:$0xf]
    %v612 = vld [vmem:[%s608 + $0xc] sm:$0xf]
    %v613 = vld [vmem:[%s608 + $0x10] sm:$0xf]
    %v614 = vld [vmem:[%s608 + $0x14] sm:$0xf]
    %v615 = vld [vmem:[%s608 + $0x18] sm:$0xf]
    %v616 = vld [vmem:[%s608 + $0x1c] sm:$0xf]
    %v617 = vrot.slane %v141, 6
    %v626 = vunpack.c.l.b16 %v609
    %v627 = vunpack.c.l.b16 %v610
    %v628 = vunpack.c.l.b16 %v611
    %v629 = vunpack.c.l.b16 %v612
    %v630 = vunpack.c.l.b16 %v613
    %v631 = vunpack.c.l.b16 %v614
    %v632 = vunpack.c.l.b16 %v615
    %v633 = vunpack.c.l.b16 %v616
    %v634 = vpack.c.b16 %v627, %v626
    %v635 = vpack.c.b16 %v629, %v628
    %v636 = vpack.c.b16 %v631, %v630
    %v637 = vpack.c.b16 %v633, %v632
    %v643 = vsel %vm185, %v617, 0
    %645 = vmatprep.subr.bf16.mxu0 0
    %646 = vmatpush1.bf16.msra.mxu0 0
    %647 = vmatprep.subr.bf16.mxu0 0
    %648 = vmatpush1.bf16.msra.mxu0 0
    %649 = vmatprep.subr.bf16.mxu0 0
    %650 = vmatpush1.bf16.msra.mxu0 0
    %651 = vmatprep.subr.bf16.mxu0 0
    %652 = vmatpush1.bf16.msra.mxu0 0
    %653 = vmatprep.subr.bf16.mxu0 0
    %654 = vmatpush1.bf16.msra.mxu0 %v637
    %655 = vmatprep.subr.bf16.mxu0 0
    %656 = vmatpush1.bf16.msra.mxu0 %v636
    %657 = vmatprep.subr.bf16.mxu0 0
    %658 = vmatpush1.bf16.msra.mxu0 %v635
    %659 = vmatprep.subr.bf16.mxu0 0
    %660 = vmatpush1.bf16.msra.mxu0 %v634
    %661 = vmatprep.subr.bf16.mxu0 0
    %662 = vmatpush2.bf16.msra.mxu0 0
    %663 = vmatprep.subr.bf16.mxu0 0
    %664 = vmatpush2.bf16.msra.mxu0 0
    %665 = vmatprep.subr.bf16.mxu0 0
    %666 = vmatpush2.bf16.msra.mxu0 0
    %667 = vmatprep.subr.bf16.mxu0 0
    %668 = vmatpush2.bf16.msra.mxu0 0
    %669 = vmatprep.subr.bf16.mxu0 0
    %670 = vmatpush2.bf16.msra.mxu0 0
    %671 = vmatprep.subr.bf16.mxu0 0
    %672 = vmatpush2.bf16.msra.mxu0 0
    %673 = vmatprep.subr.bf16.mxu0 0
    %674 = vmatpush2.bf16.msra.mxu0 0
    %675 = vmatprep.subr.bf16.mxu0 0
    %676 = vmatpush2.bf16.msra.mxu0 0
    %677 = vmatprep.mubr.bf16.mxu0 0
    %678 = vmatmul.mubr.bf16.gmra.mxu0 %v643
    %v679 = vpop.f32.mrf.mxu0
    %v680 = vadd.f32 0.0, %v679
    %v681 = vpop.f32.mrf.mxu0
    %v682 = vpop.f32.mrf.mxu0
    %v683 = vpop.f32.mrf.mxu0
    %684 = vdwg.mxu0
    %v685 = vadd.f32 %v607, %v680
    %s686 = scalar_lea.vmem %s3, 224
    %v687 = vld [vmem:[%s686] sm:$0xf]
    %v688 = vld [vmem:[%s686 + $0x4] sm:$0xf]
    %v689 = vld [vmem:[%s686 + $0x8] sm:$0xf]
    %v690 = vld [vmem:[%s686 + $0xc] sm:$0xf]
    %v691 = vld [vmem:[%s686 + $0x10] sm:$0xf]
    %v692 = vld [vmem:[%s686 + $0x14] sm:$0xf]
    %v693 = vld [vmem:[%s686 + $0x18] sm:$0xf]
    %v694 = vld [vmem:[%s686 + $0x1c] sm:$0xf]
    %v695 = vrot.slane %v141, 7
    %v704 = vunpack.c.l.b16 %v687
    %v705 = vunpack.c.l.b16 %v688
    %v706 = vunpack.c.l.b16 %v689
    %v707 = vunpack.c.l.b16 %v690
    %v708 = vunpack.c.l.b16 %v691
    %v709 = vunpack.c.l.b16 %v692
    %v710 = vunpack.c.l.b16 %v693
    %v711 = vunpack.c.l.b16 %v694
    %v712 = vpack.c.b16 %v705, %v704
    %v713 = vpack.c.b16 %v707, %v706
    %v714 = vpack.c.b16 %v709, %v708
    %v715 = vpack.c.b16 %v711, %v710
    %v721 = vsel %vm185, %v695, 0
    %723 = vmatprep.subr.bf16.mxu0 0
    %724 = vmatpush1.bf16.msra.mxu0 0
    %725 = vmatprep.subr.bf16.mxu0 0
    %726 = vmatpush1.bf16.msra.mxu0 0
    %727 = vmatprep.subr.bf16.mxu0 0
    %728 = vmatpush1.bf16.msra.mxu0 0
    %729 = vmatprep.subr.bf16.mxu0 0
    %730 = vmatpush1.bf16.msra.mxu0 0
    %731 = vmatprep.subr.bf16.mxu0 0
    %732 = vmatpush1.bf16.msra.mxu0 %v715
    %733 = vmatprep.subr.bf16.mxu0 0
    %734 = vmatpush1.bf16.msra.mxu0 %v714
    %735 = vmatprep.subr.bf16.mxu0 0
    %736 = vmatpush1.bf16.msra.mxu0 %v713
    %737 = vmatprep.subr.bf16.mxu0 0
    %738 = vmatpush1.bf16.msra.mxu0 %v712
    %739 = vmatprep.subr.bf16.mxu0 0
    %740 = vmatpush2.bf16.msra.mxu0 0
    %741 = vmatprep.subr.bf16.mxu0 0
    %742 = vmatpush2.bf16.msra.mxu0 0
    %743 = vmatprep.subr.bf16.mxu0 0
    %744 = vmatpush2.bf16.msra.mxu0 0
    %745 = vmatprep.subr.bf16.mxu0 0
    %746 = vmatpush2.bf16.msra.mxu0 0
    %747 = vmatprep.subr.bf16.mxu0 0
    %748 = vmatpush2.bf16.msra.mxu0 0
    %749 = vmatprep.subr.bf16.mxu0 0
    %750 = vmatpush2.bf16.msra.mxu0 0
    %751 = vmatprep.subr.bf16.mxu0 0
    %752 = vmatpush2.bf16.msra.mxu0 0
    %753 = vmatprep.subr.bf16.mxu0 0
    %754 = vmatpush2.bf16.msra.mxu0 0
    %755 = vmatprep.mubr.bf16.mxu0 0
    %756 = vmatmul.mubr.bf16.gmra.mxu0 %v721
    %v757 = vpop.f32.mrf.mxu0
    %v758 = vadd.f32 0.0, %v757
    %v759 = vpop.f32.mrf.mxu0
    %v760 = vpop.f32.mrf.mxu0
    %v761 = vpop.f32.mrf.mxu0
    %762 = vdwg.mxu0
    %v763 = vadd.f32 %v685, %v758
    %v764 = vld [vmem:[%s4] sm:$0x1]
    %v766 = vlaneseq
    %v767 = vshrl.u32 %v766, 7
    %v768 = vsub.s32 0, %v767
    %v769 = vrot.slane %v764, %v768
    %v771 = vadd.f32 %v763, %v769
    %v772 = vmax.f32 %v771, 0.0
    %v773 = vpack.c.bf16 %v772, %v772
    %v774 = vld [vmem:[%s5] sm:$0xf]
    %v775 = vld [vmem:[%s5 + $0x4] sm:$0xf]
    %v776 = vld [vmem:[%s5 + $0x8] sm:$0xf]
    %v777 = vld [vmem:[%s5 + $0xc] sm:$0xf]
    %v778 = vld [vmem:[%s6] sm:$0x1]
    %v780 = vlaneseq
    %v781 = vshrl.u32 %v780, 7
    %v782 = vsub.s32 0, %v781
    %v783 = vrot.slane %v778, %v782
    %v789 = vunpack.c.l.b16 %v774
    %v790 = vunpack.c.l.b16 %v775
    %v791 = vunpack.c.l.b16 %v776
    %v792 = vunpack.c.l.b16 %v777
    %v793 = vpack.c.b16 %v790, %v789
    %v794 = vpack.c.b16 %v792, %v791
    %vm797 = vcmask 261120
    %v799 = vsel %vm797, %v773, 0
    %801 = vmatprep.subr.bf16.mxu0 0
    %802 = vmatpush1.bf16.msra.mxu0 0
    %803 = vmatprep.subr.bf16.mxu0 0
    %804 = vmatpush1.bf16.msra.mxu0 0
    %805 = vmatprep.subr.bf16.mxu0 0
    %806 = vmatpush1.bf16.msra.mxu0 0
    %807 = vmatprep.subr.bf16.mxu0 0
    %808 = vmatpush1.bf16.msra.mxu0 0
    %809 = vmatprep.subr.bf16.mxu0 0
    %810 = vmatpush1.bf16.msra.mxu0 0
    %811 = vmatprep.subr.bf16.mxu0 0
    %812 = vmatpush1.bf16.msra.mxu0 0
    %813 = vmatprep.subr.bf16.mxu0 0
    %814 = vmatpush1.bf16.msra.mxu0 %v794
    %815 = vmatprep.subr.bf16.mxu0 0
    %816 = vmatpush1.bf16.msra.mxu0 %v793
    %817 = vmatprep.subr.bf16.mxu0 0
    %818 = vmatpush2.bf16.msra.mxu0 0
    %819 = vmatprep.subr.bf16.mxu0 0
    %820 = vmatpush2.bf16.msra.mxu0 0
    %821 = vmatprep.subr.bf16.mxu0 0
    %822 = vmatpush2.bf16.msra.mxu0 0
    %823 = vmatprep.subr.bf16.mxu0 0
    %824 = vmatpush2.bf16.msra.mxu0 0
    %825 = vmatprep.subr.bf16.mxu0 0
    %826 = vmatpush2.bf16.msra.mxu0 0
    %827 = vmatprep.subr.bf16.mxu0 0
    %828 = vmatpush2.bf16.msra.mxu0 0
    %829 = vmatprep.subr.bf16.mxu0 0
    %830 = vmatpush2.bf16.msra.mxu0 0
    %831 = vmatprep.subr.bf16.mxu0 0
    %832 = vmatpush2.bf16.msra.mxu0 0
    %833 = vmatprep.mubr.bf16.mxu0 0
    %834 = vmatmul.mubr.bf16.gmra.mxu0 %v799
    %v835 = vpop.f32.mrf.mxu0
    %v836 = vadd.f32 %v783, %v835
    %v837 = vpop.f32.mrf.mxu0
    %v838 = vpop.f32.mrf.mxu0
    %v839 = vpop.f32.mrf.mxu0
    %840 = vdwg.mxu0
    %v841 = vmax.f32 %v836, 0.0
    %v842 = vpack.c.bf16 %v841, %v841
    %v843 = vld [vmem:[%s7] sm:$0xf]
    %v844 = vld [vmem:[%s7 + $0x4] sm:$0xf]
    %v845 = vld [vmem:[%s7 + $0x8] sm:$0xf]
    %v846 = vld [vmem:[%s7 + $0xc] sm:$0xf]
    %v847 = vld [vmem:[%s8] sm:$0x1]
    %v849 = vlaneseq
    %v850 = vshrl.u32 %v849, 7
    %v851 = vsub.s32 0, %v850
    %v852 = vrot.slane %v847, %v851
    %v858 = vunpack.c.l.b16 %v843
    %v859 = vunpack.c.l.b16 %v844
    %v860 = vunpack.c.l.b16 %v845
    %v861 = vunpack.c.l.b16 %v846
    %v862 = vpack.c.b16 %v859, %v858
    %v863 = vpack.c.b16 %v861, %v860
    %v867 = vsel %vm797, %v842, 0
    %869 = vmatprep.subr.bf16.mxu0 0
    %870 = vmatpush1.bf16.msra.mxu0 0
    %871 = vmatprep.subr.bf16.mxu0 0
    %872 = vmatpush1.bf16.msra.mxu0 0
    %873 = vmatprep.subr.bf16.mxu0 0
    %874 = vmatpush1.bf16.msra.mxu0 0
    %875 = vmatprep.subr.bf16.mxu0 0
    %876 = vmatpush1.bf16.msra.mxu0 0
    %877 = vmatprep.subr.bf16.mxu0 0
    %878 = vmatpush1.bf16.msra.mxu0 0
    %879 = vmatprep.subr.bf16.mxu0 0
    %880 = vmatpush1.bf16.msra.mxu0 0
    %881 = vmatprep.subr.bf16.mxu0 0
    %882 = vmatpush1.bf16.msra.mxu0 %v863
    %883 = vmatprep.subr.bf16.mxu0 0
    %884 = vmatpush1.bf16.msra.mxu0 %v862
    %885 = vmatprep.subr.bf16.mxu0 0
    %886 = vmatpush2.bf16.msra.mxu0 0
    %887 = vmatprep.subr.bf16.mxu0 0
    %888 = vmatpush2.bf16.msra.mxu0 0
    %889 = vmatprep.subr.bf16.mxu0 0
    %890 = vmatpush2.bf16.msra.mxu0 0
    %891 = vmatprep.subr.bf16.mxu0 0
    %892 = vmatpush2.bf16.msra.mxu0 0
    %893 = vmatprep.subr.bf16.mxu0 0
    %894 = vmatpush2.bf16.msra.mxu0 0
    %895 = vmatprep.subr.bf16.mxu0 0
    %896 = vmatpush2.bf16.msra.mxu0 0
    %897 = vmatprep.subr.bf16.mxu0 0
    %898 = vmatpush2.bf16.msra.mxu0 0
    %899 = vmatprep.subr.bf16.mxu0 0
    %900 = vmatpush2.bf16.msra.mxu0 0
    %901 = vmatprep.mubr.bf16.mxu0 0
    %902 = vmatmul.mubr.bf16.gmra.mxu0 %v867
    %v903 = vpop.f32.mrf.mxu0
    %v904 = vadd.f32 %v852, %v903
    %v905 = vpop.f32.mrf.mxu0
    %v906 = vpop.f32.mrf.mxu0
    %v907 = vpop.f32.mrf.mxu0
    %908 = vdwg.mxu0
    %909 = vst [vmem:[#allocation2] sm:$0x3] %v904
    // Predicated region
    $region38: #{cnn_forward.1} parent=1 // pred_check
      _
    $region39: #{cnn_forward.1} parent=1 // pred_check_branch
      %911 = sbr.rel (0) target = $region41
    $region40: #{cnn_forward.1} parent=1 // pred_region
      %s913 = ssub.s32 32, 32
      %914 = vsyncadd [#allocation3], %s913
      %s916 = sshll.u32 [#allocation2], 4
      %s917 = int_to_ptr.vmem [resolvable:$true] %s916
      %919 = dma.vmem_to_hbm [thread:$0]  %s917, 32, %s9, [#allocation3]
    $region41: #{cnn_forward.1} parent=1 // pred_fallthru
      _
    // Predicated region
    $region42: #{cnn_forward.1} parent=1 // pred_check
      _
    $region43: #{cnn_forward.1} parent=1 // pred_check_branch
      %921 = sbr.rel (0) target = $region45
    $region44: #{cnn_forward.1} parent=1 // pred_region
      %922 = dma.done [#allocation3], 32
    $region45: #{cnn_forward.1} parent=1 // pred_fallthru
      _
    %923 = vsyncpa [#allocation3], 1

</llo_original>
